<compile_context>
chip_gen: v7x
topology: tpu7x:2x2x1
jax: 0.10.0
libtpu: 0.0.40
codegen_flags: <defaults>
</compile_context>

<pallas_src>
import jax
import jax.numpy as jnp
from jax import lax
from jax.experimental import pallas as pl
from jax.experimental.pallas import tpu as pltpu

N_CORNERS = 8
N_DIM = 3
_EPS = 1e-9
_CHUNK = 128                 # lane width; batch lives on the lane axis
_N_EXP_LEVELS = 9            # levels -4^7 ... -4^0, -0.25  (then a final level 0)
_FIRST_LEVEL = -(4.0 ** 7)
_LEVELS = tuple(-(4.0 ** j) for j in range(7, -2, -1))   # for the JAX reference


def _recip(x):
    """f32 reciprocal: EUP approx seed + one Newton step (near-exact, off VALU)."""
    r = pl.reciprocal(x, approx=True)
    return r * (2.0 - x * r)


def _emd_kernel(pred_ref, tgt_ref, out_ref):
    # pred_ref / tgt_ref: (cpb, 3, 8, _CHUNK)  = (chunk, xyz, corner, batch lane)
    # out_ref:            (cpb, _CHUNK)
    cpb = pred_ref.shape[0]

    @pl.loop(0, cpb)
    def _per_chunk(c):
        p = pred_ref[c]      # (3, 8, C): (xyz, pred corner k, batch lane)
        t = tgt_ref[c]       # (3, 8, C): (xyz, target corner l, batch lane)

        # sqd[l, k, b] = ||pred[b, k] - tgt[b, l]||^2
        # l -> leading (separate vregs), k -> sublanes, batch -> lanes.
        sqd = jnp.zeros((N_CORNERS, N_CORNERS, _CHUNK), jnp.float32)
        for d in range(N_DIM):                         # static unroll, pure VPU
            diff = t[d][:, None, :] - p[d][None, :, :]
            sqd = sqd + diff * diff

        remain_l0 = jnp.ones((1, N_CORNERS, _CHUNK), jnp.float32)   # pred cap (per k)
        remain_r0 = jnp.ones((N_CORNERS, 1, _CHUNK), jnp.float32)   # target cap (per l)
        match0 = jnp.zeros((N_CORNERS, N_CORNERS, _CHUNK), jnp.float32)

        def level_body(_, carry):
            level, remain_l, remain_r, match = carry
            ker = jnp.exp(level * sqd)                                    # EUP
            # sum over l == leading axis -> cheap cross-vreg adds
            suml = _EPS + jnp.sum(ker * remain_r, axis=0, keepdims=True)  # (1,8,C)
            ratio_l = remain_l * _recip(suml)                             # (1,8,C)
            kr = ker * ratio_l                                            # reused twice
            # sum over k == sublane axis -> one sublane reduce per l slice
            sumr = jnp.sum(kr, axis=1, keepdims=True) * remain_r          # (8,1,C)
            consumption = jnp.minimum(remain_r * _recip(sumr + _EPS), 1.0)
            ratio_r = consumption * remain_r                              # (8,1,C)
            remain_r = jnp.maximum(remain_r - sumr, 0.0)
            w = kr * ratio_r                                              # (8,8,C)
            match = match + w
            remain_l = jnp.maximum(
                remain_l - jnp.sum(w, axis=0, keepdims=True), 0.0)
            return (level * 0.25, remain_l, remain_r, match)

        carry0 = (jnp.asarray(_FIRST_LEVEL, dtype=jnp.float32),
                  remain_l0, remain_r0, match0)
        # 9 exp levels; fori_loop bounds live ranges (keeps us inside 64 vregs).
        _, remain_l, remain_r, match = lax.fori_loop(
            0, _N_EXP_LEVELS, level_body, carry0)

        # Final level == 0: ker == 1 -> skip exp and ker multiplies; the
        # remain_l / remain_r updates after this step are dead and skipped.
        suml = _EPS + jnp.sum(remain_r, axis=0, keepdims=True)            # (1,1,C)
        ratio_l = remain_l * _recip(suml)                                 # (1,8,C)
        sumr = jnp.sum(ratio_l, axis=1, keepdims=True) * remain_r         # (8,1,C)
        consumption = jnp.minimum(remain_r * _recip(sumr + _EPS), 1.0)
        ratio_r = consumption * remain_r
        match = match + ratio_l * ratio_r                                 # (8,8,C)

        # Epilogue: sqrt deferred until after the level loop.
        cost = jnp.sum(match * jnp.sqrt(sqd), axis=0)                     # (8, C)
        out_ref[c] = jnp.sum(cost, axis=0)                                # (C,)


def corner_bbox_emd_loss(pred_corners, target_corners):
    assert pred_corners.shape == target_corners.shape, \
        "Shape mismatch between predicted and target corners"
    assert pred_corners.shape[1:] == (N_CORNERS, N_DIM), pred_corners.shape
    b = pred_corners.shape[0]

    pad_b = (-b) % _CHUNK
    bp = b + pad_b
    nc = bp // _CHUNK                        # number of 128-wide batch chunks

    # Chunks per grid block: always a multiple of 8 (tile-aligned output block),
    # never a degenerate gcd fallback.  Prefer 32/16 when padding waste is small
    # and the grid keeps >= 2 steps (v7x megacore); otherwise 8.
    cpb = 8
    for cand in (32, 16):
        nc_pad_cand = -(-nc // cand) * cand
        if nc_pad_cand - nc <= max(4, nc // 8) and nc_pad_cand // cand >= 2:
            cpb = cand
            break
    nc_pad = -(-nc // cpb) * cpb
    grid = nc_pad // cpb

    def relayout(x):
        x = x.astype(jnp.float32)
        if pad_b:
            x = jnp.pad(x, ((0, pad_b), (0, 0), (0, 0)))
        # (bp, 8, 3) -> (nc, chunk, 8, 3) -> (nc, 3, 8, chunk): batch on lanes.
        x = x.reshape(nc, _CHUNK, N_CORNERS, N_DIM)
        x = jnp.transpose(x, (0, 3, 2, 1))
        if nc_pad > nc:                      # pad chunks are all-zero -> finite
            x = jnp.pad(x, ((0, nc_pad - nc), (0, 0), (0, 0), (0, 0)))
        return x

    p = relayout(pred_corners)
    t = relayout(target_corners)

    out = pl.pallas_call(
        _emd_kernel,
        out_shape=jax.ShapeDtypeStruct((nc_pad, _CHUNK), jnp.float32),
        grid_spec=pltpu.PrefetchScalarGridSpec(
            num_scalar_prefetch=0,
            grid=(grid,),
            in_specs=[
                pl.BlockSpec((cpb, N_DIM, N_CORNERS, _CHUNK),
                             lambda i: (i, 0, 0, 0)),
                pl.BlockSpec((cpb, N_DIM, N_CORNERS, _CHUNK),
                             lambda i: (i, 0, 0, 0)),
            ],
            out_specs=pl.BlockSpec((cpb, _CHUNK), lambda i: (i, 0)),
        ),
        compiler_params=pltpu.CompilerParams(
            dimension_semantics=("parallel",)),
    )(p, t)
    return out.reshape(nc_pad * _CHUNK)[:b]


class CornerBoundingBoxEMDLoss:
    """JAX/Pallas equivalent of the PyTorch CornerBoundingBoxEMDLoss module."""

    def __call__(self, pred_corners, target_corners):
        return corner_bbox_emd_loss(pred_corners, target_corners)


def _emd_reference(pred, tgt):
    """Pure-JAX reference (same approxmatch semantics) for sanity checking."""
    pred = pred.astype(jnp.float32)
    tgt = tgt.astype(jnp.float32)
    diff = pred[:, :, None, :] - tgt[:, None, :, :]
    sqd = jnp.sum(diff * diff, axis=-1)
    dist = jnp.sqrt(sqd)
    b = pred.shape[0]
    remain_l = jnp.ones((b, N_CORNERS, 1), jnp.float32)
    remain_r = jnp.ones((b, 1, N_CORNERS), jnp.float32)
    match = jnp.zeros((b, N_CORNERS, N_CORNERS), jnp.float32)
    for level in _LEVELS + (0.0,):
        ker = jnp.exp(level * sqd)
        suml = _EPS + jnp.sum(ker * remain_r, axis=2, keepdims=True)
        ratio_l = remain_l / suml
        sumr = jnp.sum(ker * ratio_l, axis=1, keepdims=True) * remain_r
        ratio_r = jnp.minimum(remain_r / (sumr + _EPS), 1.0) * remain_r
        remain_r = jnp.maximum(remain_r - sumr, 0.0)
        w = ker * ratio_l * ratio_r
        match = match + w
        remain_l = jnp.maximum(remain_l - jnp.sum(w, axis=2, keepdims=True), 0.0)
    return jnp.sum(match * dist, axis=(1, 2))


if __name__ == "__main__":
    key = jax.random.PRNGKey(0)
    kp, kt = jax.random.split(key)
    B = 16
    pred = jax.random.normal(kp, (B, N_CORNERS, N_DIM), dtype=jnp.float32)
    tgt = jax.random.normal(kt, (B, N_CORNERS, N_DIM), dtype=jnp.float32)

    loss_fn = CornerBoundingBoxEMDLoss()
    loss = loss_fn(pred, tgt)
    jax.block_until_ready(loss)

    ref = _emd_reference(pred, tgt)
    assert loss.shape == (B,), loss.shape
    assert bool(jnp.all(jnp.isfinite(loss)))
    assert bool(jnp.allclose(loss, ref, rtol=1e-4, atol=1e-4)), (loss, ref)
    print("KERNEL_OK")
</pallas_src>

<mosaic_0001>
module attributes {stable_mosaic.version = 11 : i64} {
  func.func @_emd_kernel(%arg0: i32, %arg1: memref<8x3x8x128xf32, #tpu.memory_space<vmem>>, %arg2: memref<8x3x8x128xf32, #tpu.memory_space<vmem>>, %arg3: memref<8x128xf32, #tpu.memory_space<vmem>>) attributes {dimension_semantics = [#tpu.dimension_semantics<parallel>], iteration_bounds = array<i64: 1>, scalar_prefetch = 0 : i64, scratch_operands = 0 : i64, tpu.core_type = #tpu.core_type<tc>, window_params = [{transform_indices = @transform_0, window_bounds = array<i64: 8, 3, 8, 128>}, {transform_indices = @transform_1, window_bounds = array<i64: 8, 3, 8, 128>}, {transform_indices = @transform_2, window_bounds = array<i64: 8, 128>}]} {
    %c0_i32 = arith.constant 0 : i32
    %c8_i32 = arith.constant 8 : i32
    %0 = arith.addi %c0_i32, %c8_i32 : i32
    %c1_i32 = arith.constant 1 : i32
    scf.for %arg4 = %c0_i32 to %0 step %c1_i32  : i32 {
      %c1_i32_1 = arith.constant 1 : i32
      %1 = arith.muli %arg4, %c1_i32_1 : i32
      %c0_i32_2 = arith.constant 0 : i32
      %2 = arith.addi %c0_i32_2, %1 : i32
      %3 = arith.index_cast %2 : i32 to index
      %c0 = arith.constant 0 : index
      %c0_3 = arith.constant 0 : index
      %c0_4 = arith.constant 0 : index
      %4 = vector.load %arg1[%3, %c0, %c0_3, %c0_4] : memref<8x3x8x128xf32, #tpu.memory_space<vmem>>, vector<1x3x8x128xf32>
      %5 = vector.shape_cast %4 : vector<1x3x8x128xf32> to vector<3x8x128xf32>
      %6 = arith.index_cast %2 : i32 to index
      %c0_5 = arith.constant 0 : index
      %c0_6 = arith.constant 0 : index
      %c0_7 = arith.constant 0 : index
      %7 = vector.load %arg2[%6, %c0_5, %c0_6, %c0_7] : memref<8x3x8x128xf32, #tpu.memory_space<vmem>>, vector<1x3x8x128xf32>
      %8 = vector.shape_cast %7 : vector<1x3x8x128xf32> to vector<3x8x128xf32>
      %cst = arith.constant 0.000000e+00 : f32
      %9 = vector.broadcast %cst : f32 to vector<8x8x128xf32>
      %10 = vector.extract_strided_slice %8 {offsets = [0, 0, 0], sizes = [1, 8, 128], strides = [1, 1, 1]} : vector<3x8x128xf32> to vector<1x8x128xf32>
      %11 = vector.shape_cast %10 : vector<1x8x128xf32> to vector<8x128xf32>
      %12 = vector.shape_cast %11 : vector<8x128xf32> to vector<8x1x128xf32>
      %13 = vector.extract_strided_slice %5 {offsets = [0, 0, 0], sizes = [1, 8, 128], strides = [1, 1, 1]} : vector<3x8x128xf32> to vector<1x8x128xf32>
      %14 = vector.shape_cast %13 : vector<1x8x128xf32> to vector<8x128xf32>
      %15 = vector.shape_cast %14 : vector<8x128xf32> to vector<1x8x128xf32>
      %16 = vector.broadcast %12 : vector<8x1x128xf32> to vector<8x8x128xf32>
      %17 = vector.broadcast %15 : vector<1x8x128xf32> to vector<8x8x128xf32>
      %18 = arith.subf %16, %17 : vector<8x8x128xf32>
      %19 = arith.mulf %18, %18 : vector<8x8x128xf32>
      %20 = arith.addf %9, %19 : vector<8x8x128xf32>
      %21 = vector.extract_strided_slice %8 {offsets = [1, 0, 0], sizes = [1, 8, 128], strides = [1, 1, 1]} : vector<3x8x128xf32> to vector<1x8x128xf32>
      %22 = vector.shape_cast %21 : vector<1x8x128xf32> to vector<8x128xf32>
      %23 = vector.shape_cast %22 : vector<8x128xf32> to vector<8x1x128xf32>
      %24 = vector.extract_strided_slice %5 {offsets = [1, 0, 0], sizes = [1, 8, 128], strides = [1, 1, 1]} : vector<3x8x128xf32> to vector<1x8x128xf32>
      %25 = vector.shape_cast %24 : vector<1x8x128xf32> to vector<8x128xf32>
      %26 = vector.shape_cast %25 : vector<8x128xf32> to vector<1x8x128xf32>
      %27 = vector.broadcast %23 : vector<8x1x128xf32> to vector<8x8x128xf32>
      %28 = vector.broadcast %26 : vector<1x8x128xf32> to vector<8x8x128xf32>
      %29 = arith.subf %27, %28 : vector<8x8x128xf32>
      %30 = arith.mulf %29, %29 : vector<8x8x128xf32>
      %31 = arith.addf %20, %30 : vector<8x8x128xf32>
      %32 = vector.extract_strided_slice %8 {offsets = [2, 0, 0], sizes = [1, 8, 128], strides = [1, 1, 1]} : vector<3x8x128xf32> to vector<1x8x128xf32>
      %33 = vector.shape_cast %32 : vector<1x8x128xf32> to vector<8x128xf32>
      %34 = vector.shape_cast %33 : vector<8x128xf32> to vector<8x1x128xf32>
      %35 = vector.extract_strided_slice %5 {offsets = [2, 0, 0], sizes = [1, 8, 128], strides = [1, 1, 1]} : vector<3x8x128xf32> to vector<1x8x128xf32>
      %36 = vector.shape_cast %35 : vector<1x8x128xf32> to vector<8x128xf32>
      %37 = vector.shape_cast %36 : vector<8x128xf32> to vector<1x8x128xf32>
      %38 = vector.broadcast %34 : vector<8x1x128xf32> to vector<8x8x128xf32>
      %39 = vector.broadcast %37 : vector<1x8x128xf32> to vector<8x8x128xf32>
      %40 = arith.subf %38, %39 : vector<8x8x128xf32>
      %41 = arith.mulf %40, %40 : vector<8x8x128xf32>
      %42 = arith.addf %31, %41 : vector<8x8x128xf32>
      %cst_8 = arith.constant 1.000000e+00 : f32
      %43 = vector.broadcast %cst_8 : f32 to vector<1x8x128xf32>
      %cst_9 = arith.constant 1.000000e+00 : f32
      %44 = vector.broadcast %cst_9 : f32 to vector<8x1x128xf32>
      %cst_10 = arith.constant 0.000000e+00 : f32
      %45 = vector.broadcast %cst_10 : f32 to vector<8x8x128xf32>
      %cst_11 = arith.constant -1.638400e+04 : f32
      %c0_i32_12 = arith.constant 0 : i32
      %c9_i32 = arith.constant 9 : i32
      %46 = arith.addi %c0_i32_12, %c9_i32 : i32
      %c1_i32_13 = arith.constant 1 : i32
      %47:4 = scf.for %arg5 = %c0_i32_12 to %46 step %c1_i32_13 iter_args(%arg6 = %cst_11, %arg7 = %43, %arg8 = %44, %arg9 = %45) -> (f32, vector<1x8x128xf32>, vector<8x1x128xf32>, vector<8x8x128xf32>)  : i32 {
        %86 = vector.broadcast %arg6 : f32 to vector<8x8x128xf32>
        %87 = arith.mulf %86, %42 : vector<8x8x128xf32>
        %88 = math.exp %87 : vector<8x8x128xf32>
        %89 = vector.broadcast %arg8 : vector<8x1x128xf32> to vector<8x8x128xf32>
        %90 = arith.mulf %88, %89 : vector<8x8x128xf32>
        %cst_24 = arith.constant dense<0.000000e+00> : vector<8x128xf32>
        %91 = vector.multi_reduction <add>, %90, %cst_24 [0] : vector<8x8x128xf32> to vector<8x128xf32>
        %92 = vector.shape_cast %91 : vector<8x128xf32> to vector<1x8x128xf32>
        %cst_25 = arith.constant 9.99999971E-10 : f32
        %93 = vector.broadcast %cst_25 : f32 to vector<1x8x128xf32>
        %94 = arith.addf %93, %92 : vector<1x8x128xf32>
        %95 = tpu.reciprocal %94 {approx = true} : vector<1x8x128xf32> -> vector<1x8x128xf32>
        %96 = arith.mulf %94, %95 : vector<1x8x128xf32>
        %cst_26 = arith.constant 2.000000e+00 : f32
        %97 = vector.broadcast %cst_26 : f32 to vector<1x8x128xf32>
        %98 = arith.subf %97, %96 : vector<1x8x128xf32>
        %99 = arith.mulf %95, %98 : vector<1x8x128xf32>
        %100 = arith.mulf %arg7, %99 : vector<1x8x128xf32>
        %101 = vector.broadcast %100 : vector<1x8x128xf32> to vector<8x8x128xf32>
        %102 = arith.mulf %88, %101 : vector<8x8x128xf32>
        %cst_27 = arith.constant dense<0.000000e+00> : vector<8x128xf32>
        %103 = vector.multi_reduction <add>, %102, %cst_27 [1] : vector<8x8x128xf32> to vector<8x128xf32>
        %104 = vector.shape_cast %103 : vector<8x128xf32> to vector<8x1x128xf32>
        %105 = arith.mulf %104, %arg8 : vector<8x1x128xf32>
        %cst_28 = arith.constant 9.99999971E-10 : f32
        %106 = vector.broadcast %cst_28 : f32 to vector<8x1x128xf32>
        %107 = arith.addf %105, %106 : vector<8x1x128xf32>
        %108 = tpu.reciprocal %107 {approx = true} : vector<8x1x128xf32> -> vector<8x1x128xf32>
        %109 = arith.mulf %107, %108 : vector<8x1x128xf32>
        %cst_29 = arith.constant 2.000000e+00 : f32
        %110 = vector.broadcast %cst_29 : f32 to vector<8x1x128xf32>
        %111 = arith.subf %110, %109 : vector<8x1x128xf32>
        %112 = arith.mulf %108, %111 : vector<8x1x128xf32>
        %113 = arith.mulf %arg8, %112 : vector<8x1x128xf32>
        %cst_30 = arith.constant 1.000000e+00 : f32
        %114 = vector.broadcast %cst_30 : f32 to vector<8x1x128xf32>
        %115 = arith.minimumf %113, %114 : vector<8x1x128xf32>
        %116 = arith.mulf %115, %arg8 : vector<8x1x128xf32>
        %117 = arith.subf %arg8, %105 : vector<8x1x128xf32>
        %cst_31 = arith.constant 0.000000e+00 : f32
        %118 = vector.broadcast %cst_31 : f32 to vector<8x1x128xf32>
        %119 = arith.maximumf %117, %118 : vector<8x1x128xf32>
        %120 = vector.broadcast %116 : vector<8x1x128xf32> to vector<8x8x128xf32>
        %121 = arith.mulf %102, %120 : vector<8x8x128xf32>
        %122 = arith.addf %arg9, %121 : vector<8x8x128xf32>
        %cst_32 = arith.constant dense<0.000000e+00> : vector<8x128xf32>
        %123 = vector.multi_reduction <add>, %121, %cst_32 [0] : vector<8x8x128xf32> to vector<8x128xf32>
        %124 = vector.shape_cast %123 : vector<8x128xf32> to vector<1x8x128xf32>
        %125 = arith.subf %arg7, %124 : vector<1x8x128xf32>
        %cst_33 = arith.constant 0.000000e+00 : f32
        %126 = vector.broadcast %cst_33 : f32 to vector<1x8x128xf32>
        %127 = arith.maximumf %125, %126 : vector<1x8x128xf32>
        %cst_34 = arith.constant 2.500000e-01 : f32
        %128 = arith.mulf %arg6, %cst_34 : f32
        scf.yield %128, %127, %119, %122 : f32, vector<1x8x128xf32>, vector<8x1x128xf32>, vector<8x8x128xf32>
      }
      %cst_14 = arith.constant dense<0.000000e+00> : vector<1x128xf32>
      %48 = vector.multi_reduction <add>, %47#2, %cst_14 [0] : vector<8x1x128xf32> to vector<1x128xf32>
      %49 = vector.shape_cast %48 : vector<1x128xf32> to vector<1x1x128xf32>
      %cst_15 = arith.constant 9.99999971E-10 : f32
      %50 = vector.broadcast %cst_15 : f32 to vector<1x1x128xf32>
      %51 = arith.addf %50, %49 : vector<1x1x128xf32>
      %52 = tpu.reciprocal %51 {approx = true} : vector<1x1x128xf32> -> vector<1x1x128xf32>
      %53 = arith.mulf %51, %52 : vector<1x1x128xf32>
      %cst_16 = arith.constant 2.000000e+00 : f32
      %54 = vector.broadcast %cst_16 : f32 to vector<1x1x128xf32>
      %55 = arith.subf %54, %53 : vector<1x1x128xf32>
      %56 = arith.mulf %52, %55 : vector<1x1x128xf32>
      %57 = vector.broadcast %56 : vector<1x1x128xf32> to vector<1x8x128xf32>
      %58 = arith.mulf %47#1, %57 : vector<1x8x128xf32>
      %cst_17 = arith.constant dense<0.000000e+00> : vector<1x128xf32>
      %59 = vector.multi_reduction <add>, %58, %cst_17 [1] : vector<1x8x128xf32> to vector<1x128xf32>
      %60 = vector.shape_cast %59 : vector<1x128xf32> to vector<1x1x128xf32>
      %61 = vector.broadcast %60 : vector<1x1x128xf32> to vector<8x1x128xf32>
      %62 = arith.mulf %61, %47#2 : vector<8x1x128xf32>
      %cst_18 = arith.constant 9.99999971E-10 : f32
      %63 = vector.broadcast %cst_18 : f32 to vector<8x1x128xf32>
      %64 = arith.addf %62, %63 : vector<8x1x128xf32>
      %65 = tpu.reciprocal %64 {approx = true} : vector<8x1x128xf32> -> vector<8x1x128xf32>
      %66 = arith.mulf %64, %65 : vector<8x1x128xf32>
      %cst_19 = arith.constant 2.000000e+00 : f32
      %67 = vector.broadcast %cst_19 : f32 to vector<8x1x128xf32>
      %68 = arith.subf %67, %66 : vector<8x1x128xf32>
      %69 = arith.mulf %65, %68 : vector<8x1x128xf32>
      %70 = arith.mulf %47#2, %69 : vector<8x1x128xf32>
      %cst_20 = arith.constant 1.000000e+00 : f32
      %71 = vector.broadcast %cst_20 : f32 to vector<8x1x128xf32>
      %72 = arith.minimumf %70, %71 : vector<8x1x128xf32>
      %73 = arith.mulf %72, %47#2 : vector<8x1x128xf32>
      %74 = vector.broadcast %58 : vector<1x8x128xf32> to vector<8x8x128xf32>
      %75 = vector.broadcast %73 : vector<8x1x128xf32> to vector<8x8x128xf32>
      %76 = arith.mulf %74, %75 : vector<8x8x128xf32>
      %77 = arith.addf %47#3, %76 : vector<8x8x128xf32>
      %78 = math.sqrt %42 : vector<8x8x128xf32>
      %79 = arith.mulf %77, %78 : vector<8x8x128xf32>
      %cst_21 = arith.constant dense<0.000000e+00> : vector<8x128xf32>
      %80 = vector.multi_reduction <add>, %79, %cst_21 [0] : vector<8x8x128xf32> to vector<8x128xf32>
      %cst_22 = arith.constant dense<0.000000e+00> : vector<128xf32>
      %81 = vector.multi_reduction <add>, %80, %cst_22 [0] : vector<8x128xf32> to vector<128xf32>
      %82 = arith.index_cast %2 : i32 to index
      %c0_23 = arith.constant 0 : index
      %83 = vector.load %arg3[%82, %c0_23] : memref<8x128xf32, #tpu.memory_space<vmem>>, vector<1x128xf32>
      %84 = vector.shape_cast %83 : vector<1x128xf32> to vector<128xf32>
      %85 = vector.shape_cast %81 : vector<128xf32> to vector<1x128xf32>
      tpu.vector_store %arg3[%82, %c0_23], %85 {strides = array<i32>} : memref<8x128xf32, #tpu.memory_space<vmem>>, vector<1x128xf32>,
    }
    %c8_i32_0 = arith.constant 8 : i32
    return
  }
  func.func @transform_0(%arg0: i32) -> (i32, i32, i32, i32) {
    %c0_i32 = arith.constant 0 : i32
    %c0_i32_0 = arith.constant 0 : i32
    %c0_i32_1 = arith.constant 0 : i32
    %c0_i32_2 = arith.constant 0 : i32
    return %arg0, %c0_i32, %c0_i32_0, %c0_i32_1 : i32, i32, i32, i32
  }
  func.func @transform_1(%arg0: i32) -> (i32, i32, i32, i32) {
    %c0_i32 = arith.constant 0 : i32
    %c0_i32_0 = arith.constant 0 : i32
    %c0_i32_1 = arith.constant 0 : i32
    %c0_i32_2 = arith.constant 0 : i32
    return %arg0, %c0_i32, %c0_i32_0, %c0_i32_1 : i32, i32, i32, i32
  }
  func.func @transform_2(%arg0: i32) -> (i32, i32) {
    %c0_i32 = arith.constant 0 : i32
    %c0_i32_0 = arith.constant 0 : i32
    return %arg0, %c0_i32 : i32, i32
  }
}

</mosaic_0001>

<llo_original>
// kernel: tpu_custom_call.1
$region0: #{tpu_custom_call.1}
  #allocation0 [shape = 'u32[]', space=smem, size = 0x4, offset = 0x4, fixed_abs, tag = 'smem constant byte address 0x4 - core index']
  #allocation1 [shape = 'u32[144,128]{1,0:T(1,128)}', space=vmem, size = 0x12000, scoped, tag = 'internal scratch']
  %s0 = inlined_call_operand.hbm [shape: f32[8,3,8,128], index: 0, kind: input, shape index: {}]
  %s1 = inlined_call_operand.hbm [shape: f32[8,3,8,128], index: 1, kind: input, shape index: {}]
  %s2 = inlined_call_operand.hbm [shape: f32[8,128], index: 2, kind: output, shape index: {}]
  %s3 = sld [smem:[#allocation0]]
  $region40: #{tpu_custom_call.1} parent=0
    _
  %s5 = ssub.s32 1, %s3
  %s6 = scalar_select 0, %s5, %s3
  $region1: #{tpu_custom_call.1} parent=0
    #allocation2 [shape = 'u8[98304]{0}', space=vmem, size = 0x18000, scoped, tag = 'input window, operand 0, single buffered']
    #allocation3 [shape = 's32[1]{0}', space=sflag, size = 0x4, scoped, tag = 'scoped memory for tpu_custom_call.1']
    #allocation4 [shape = 's32[1]{0}', space=sflag, size = 0x4, scoped, tag = 'scoped memory for tpu_custom_call.1']
    #allocation5 [shape = 'u8[98304]{0}', space=vmem, size = 0x18000, scoped, tag = 'input window, operand 1, single buffered']
    #allocation6 [shape = 's32[1]{0}', space=sflag, size = 0x4, scoped, tag = 'scoped memory for tpu_custom_call.1']
    #allocation7 [shape = 'u8[4096]{0}', space=vmem, size = 0x1000, scoped, tag = 'output window, operand 0, single buffered']
    %7 = vsyncpa [#allocation3], 0
    %8 = vsyncpa [#allocation6], 0
    %9 = vsyncpa [#allocation4], 0
    // Predicated region
    $region2: #{tpu_custom_call.1} parent=1 // pred_check
      _
    $region3: #{tpu_custom_call.1} parent=1 // pred_check_branch
      %11 = sbr.rel (0) target = $region5
    $region4: #{tpu_custom_call.1} parent=1 // pred_region
      %s13 = ssub.s32 3072, 3072
      %14 = vsyncadd [#allocation3], %s13
      %s15 = sshll.u32 [#allocation2], 4
      %s16 = int_to_ptr.vmem [resolvable:$true] %s15
      %21 = dma.hbm_to_vmem [thread:$0]  %s0, 3072, %s16, [#allocation3], 128, 128, 8
    $region5: #{tpu_custom_call.1} parent=1 // pred_fallthru
      _
    // Predicated region
    $region6: #{tpu_custom_call.1} parent=1 // pred_check
      _
    $region7: #{tpu_custom_call.1} parent=1 // pred_check_branch
      %23 = sbr.rel (0) target = $region9
    $region8: #{tpu_custom_call.1} parent=1 // pred_region
      %s25 = ssub.s32 3072, 3072
      %26 = vsyncadd [#allocation6], %s25
      %s27 = sshll.u32 [#allocation5], 4
      %s28 = int_to_ptr.vmem [resolvable:$true] %s27
      %33 = dma.hbm_to_vmem [thread:$0]  %s1, 3072, %s28, [#allocation6], 128, 128, 8
    $region9: #{tpu_custom_call.1} parent=1 // pred_fallthru
      _
    // Predicated region
    $region10: #{tpu_custom_call.1} parent=1 // pred_check
      _
    $region11: #{tpu_custom_call.1} parent=1 // pred_check_branch
      %35 = sbr.rel (0) target = $region13
    $region12: #{tpu_custom_call.1} parent=1 // pred_region
      %36 = dma.done [#allocation3], 3072
    $region13: #{tpu_custom_call.1} parent=1 // pred_fallthru
      _
    // Predicated region
    $region14: #{tpu_custom_call.1} parent=1 // pred_check
      _
    $region15: #{tpu_custom_call.1} parent=1 // pred_check_branch
      %38 = sbr.rel (0) target = $region17
    $region16: #{tpu_custom_call.1} parent=1 // pred_region
      %39 = dma.done [#allocation6], 3072
    $region17: #{tpu_custom_call.1} parent=1 // pred_fallthru
      _
    loop: start=0, step=1, limit=8
    $region18: #{tpu_custom_call.1} parent=1 // loop_pre_header
      _
    $region19: #{tpu_custom_call.1} parent=1 // loop_header
      %s41 = sphi 0, %s45
      %p42 = scmp.ge.s32.totalorder %s41, 8
    $region20: #{tpu_custom_call.1} parent=1 // loop_header_branch
      %44 = sbr.rel (%p42) target = $region24
    $region21: #{tpu_custom_call.1} parent=1 // loop_body
      %s46 = smul.u32 %s41, 24
      %s47 = scalar_lea.vmem [#allocation2], %s46
      %v48 = vld [vmem:[%s47] sm:$0xff]
      %v49 = vld [vmem:[%s47 + $0x8] sm:$0xff]
      %v50 = vld [vmem:[%s47 + $0x10] sm:$0xff]
      %s51 = scalar_lea.vmem [#allocation5], %s46
      %v52 = vld [vmem:[%s51] sm:$0xff]
      %v53 = vld [vmem:[%s51 + $0x8] sm:$0xff]
      %v54 = vld [vmem:[%s51 + $0x10] sm:$0xff]
      %v56 = vcombine.high %v52, %v52
      %v58 = vunpack.c.l.s4 1966171168
      %v59 = vunpack.c.0.s8 %v58
      %v60 = vlaneseq
      %v61 = vshrl.u32 %v60, 7
      %v62 = vsub.s32 %v59, %v61
      %v63 = vrot.slane %v52, %v62
      %v65 = vunpack.c.l.s4 1966171168
      %v66 = vunpack.c.0.s8 %v65
      %v67 = vlaneseq
      %v68 = vshrl.u32 %v67, 7
      %v69 = vsub.s32 %v66, %v68
      %v70 = vrot.slane %v56, %v69
      %v71 = vcombine.high %v63, %v63
      %v72 = vcombine.high %v70, %v70
      %v74 = vunpack.c.l.s4 1966171168
      %v75 = vunpack.c.0.s8 %v74
      %v76 = vlaneseq
      %v77 = vshrl.u32 %v76, 7
      %v78 = vsub.s32 %v75, %v77
      %v79 = vrot.slane %v63, %v78
      %v81 = vunpack.c.l.s4 1966171168
      %v82 = vunpack.c.0.s8 %v81
      %v83 = vlaneseq
      %v84 = vshrl.u32 %v83, 7
      %v85 = vsub.s32 %v82, %v84
      %v86 = vrot.slane %v70, %v85
      %v88 = vunpack.c.l.s4 1966171168
      %v89 = vunpack.c.0.s8 %v88
      %v90 = vlaneseq
      %v91 = vshrl.u32 %v90, 7
      %v92 = vsub.s32 %v89, %v91
      %v93 = vrot.slane %v71, %v92
      %v95 = vunpack.c.l.s4 1966171168
      %v96 = vunpack.c.0.s8 %v95
      %v97 = vlaneseq
      %v98 = vshrl.u32 %v97, 7
      %v99 = vsub.s32 %v96, %v98
      %v100 = vrot.slane %v72, %v99
      %v101 = vcombine.high %v79, %v79
      %v102 = vcombine.high %v86, %v86
      %v103 = vcombine.high %v93, %v93
      %v104 = vcombine.high %v100, %v100
      %v105 = vlaneseq
      %v106 = vshrl.u32 %v105, 7
      %v107 = vsub.s32 0, %v106
      %v108 = vrot.slane %v79, %v107
      %v109 = vlaneseq
      %v110 = vshrl.u32 %v109, 7
      %v111 = vsub.s32 0, %v110
      %v112 = vrot.slane %v93, %v111
      %v113 = vlaneseq
      %v114 = vshrl.u32 %v113, 7
      %v115 = vsub.s32 0, %v114
      %v116 = vrot.slane %v101, %v115
      %v117 = vlaneseq
      %v118 = vshrl.u32 %v117, 7
      %v119 = vsub.s32 0, %v118
      %v120 = vrot.slane %v103, %v119
      %v121 = vlaneseq
      %v122 = vshrl.u32 %v121, 7
      %v123 = vsub.s32 0, %v122
      %v124 = vrot.slane %v86, %v123
      %v125 = vlaneseq
      %v126 = vshrl.u32 %v125, 7
      %v127 = vsub.s32 0, %v126
      %v128 = vrot.slane %v100, %v127
      %v129 = vlaneseq
      %v130 = vshrl.u32 %v129, 7
      %v131 = vsub.s32 0, %v130
      %v132 = vrot.slane %v102, %v131
      %v133 = vlaneseq
      %v134 = vshrl.u32 %v133, 7
      %v135 = vsub.s32 0, %v134
      %v136 = vrot.slane %v104, %v135
      %v145 = vsub.f32 %v108, %v48
      %v146 = vsub.f32 %v112, %v48
      %v147 = vsub.f32 %v116, %v48
      %v148 = vsub.f32 %v120, %v48
      %v149 = vsub.f32 %v124, %v48
      %v150 = vsub.f32 %v128, %v48
      %v151 = vsub.f32 %v132, %v48
      %v152 = vsub.f32 %v136, %v48
      %v153 = vmul.f32 %v145, %v145
      %v154 = vmul.f32 %v146, %v146
      %v155 = vmul.f32 %v147, %v147
      %v156 = vmul.f32 %v148, %v148
      %v157 = vmul.f32 %v149, %v149
      %v158 = vmul.f32 %v150, %v150
      %v159 = vmul.f32 %v151, %v151
      %v160 = vmul.f32 %v152, %v152
      %v161 = vadd.f32 %v153, 0.0
      %v162 = vadd.f32 %v154, 0.0
      %v163 = vadd.f32 %v155, 0.0
      %v164 = vadd.f32 %v156, 0.0
      %v165 = vadd.f32 %v157, 0.0
      %v166 = vadd.f32 %v158, 0.0
      %v167 = vadd.f32 %v159, 0.0
      %v168 = vadd.f32 %v160, 0.0
      %v170 = vcombine.high %v53, %v53
      %v172 = vunpack.c.l.s4 1966171168
      %v173 = vunpack.c.0.s8 %v172
      %v174 = vlaneseq
      %v175 = vshrl.u32 %v174, 7
      %v176 = vsub.s32 %v173, %v175
      %v177 = vrot.slane %v53, %v176
      %v179 = vunpack.c.l.s4 1966171168
      %v180 = vunpack.c.0.s8 %v179
      %v181 = vlaneseq
      %v182 = vshrl.u32 %v181, 7
      %v183 = vsub.s32 %v180, %v182
      %v184 = vrot.slane %v170, %v183
      %v185 = vcombine.high %v177, %v177
      %v186 = vcombine.high %v184, %v184
      %v188 = vunpack.c.l.s4 1966171168
      %v189 = vunpack.c.0.s8 %v188
      %v190 = vlaneseq
      %v191 = vshrl.u32 %v190, 7
      %v192 = vsub.s32 %v189, %v191
      %v193 = vrot.slane %v177, %v192
      %v195 = vunpack.c.l.s4 1966171168
      %v196 = vunpack.c.0.s8 %v195
      %v197 = vlaneseq
      %v198 = vshrl.u32 %v197, 7
      %v199 = vsub.s32 %v196, %v198
      %v200 = vrot.slane %v184, %v199
      %v202 = vunpack.c.l.s4 1966171168
      %v203 = vunpack.c.0.s8 %v202
      %v204 = vlaneseq
      %v205 = vshrl.u32 %v204, 7
      %v206 = vsub.s32 %v203, %v205
      %v207 = vrot.slane %v185, %v206
      %v209 = vunpack.c.l.s4 1966171168
      %v210 = vunpack.c.0.s8 %v209
      %v211 = vlaneseq
      %v212 = vshrl.u32 %v211, 7
      %v213 = vsub.s32 %v210, %v212
      %v214 = vrot.slane %v186, %v213
      %v215 = vcombine.high %v193, %v193
      %v216 = vcombine.high %v200, %v200
      %v217 = vcombine.high %v207, %v207
      %v218 = vcombine.high %v214, %v214
      %v219 = vlaneseq
      %v220 = vshrl.u32 %v219, 7
      %v221 = vsub.s32 0, %v220
      %v222 = vrot.slane %v193, %v221
      %v223 = vlaneseq
      %v224 = vshrl.u32 %v223, 7
      %v225 = vsub.s32 0, %v224
      %v226 = vrot.slane %v207, %v225
      %v227 = vlaneseq
      %v228 = vshrl.u32 %v227, 7
      %v229 = vsub.s32 0, %v228
      %v230 = vrot.slane %v215, %v229
      %v231 = vlaneseq
      %v232 = vshrl.u32 %v231, 7
      %v233 = vsub.s32 0, %v232
      %v234 = vrot.slane %v217, %v233
      %v235 = vlaneseq
      %v236 = vshrl.u32 %v235, 7
      %v237 = vsub.s32 0, %v236
      %v238 = vrot.slane %v200, %v237
      %v239 = vlaneseq
      %v240 = vshrl.u32 %v239, 7
      %v241 = vsub.s32 0, %v240
      %v242 = vrot.slane %v214, %v241
      %v243 = vlaneseq
      %v244 = vshrl.u32 %v243, 7
      %v245 = vsub.s32 0, %v244
      %v246 = vrot.slane %v216, %v245
      %v247 = vlaneseq
      %v248 = vshrl.u32 %v247, 7
      %v249 = vsub.s32 0, %v248
      %v250 = vrot.slane %v218, %v249
      %v259 = vsub.f32 %v222, %v49
      %v260 = vsub.f32 %v226, %v49
      %v261 = vsub.f32 %v230, %v49
      %v262 = vsub.f32 %v234, %v49
      %v263 = vsub.f32 %v238, %v49
      %v264 = vsub.f32 %v242, %v49
      %v265 = vsub.f32 %v246, %v49
      %v266 = vsub.f32 %v250, %v49
      %v267 = vmul.f32 %v259, %v259
      %v268 = vmul.f32 %v260, %v260
      %v269 = vmul.f32 %v261, %v261
      %v270 = vmul.f32 %v262, %v262
      %v271 = vmul.f32 %v263, %v263
      %v272 = vmul.f32 %v264, %v264
      %v273 = vmul.f32 %v265, %v265
      %v274 = vmul.f32 %v266, %v266
      %v275 = vadd.f32 %v161, %v267
      %v276 = vadd.f32 %v162, %v268
      %v277 = vadd.f32 %v163, %v269
      %v278 = vadd.f32 %v164, %v270
      %v279 = vadd.f32 %v165, %v271
      %v280 = vadd.f32 %v166, %v272
      %v281 = vadd.f32 %v167, %v273
      %v282 = vadd.f32 %v168, %v274
      %v284 = vcombine.high %v54, %v54
      %v286 = vunpack.c.l.s4 1966171168
      %v287 = vunpack.c.0.s8 %v286
      %v288 = vlaneseq
      %v289 = vshrl.u32 %v288, 7
      %v290 = vsub.s32 %v287, %v289
      %v291 = vrot.slane %v54, %v290
      %v293 = vunpack.c.l.s4 1966171168
      %v294 = vunpack.c.0.s8 %v293
      %v295 = vlaneseq
      %v296 = vshrl.u32 %v295, 7
      %v297 = vsub.s32 %v294, %v296
      %v298 = vrot.slane %v284, %v297
      %v299 = vcombine.high %v291, %v291
      %v300 = vcombine.high %v298, %v298
      %v302 = vunpack.c.l.s4 1966171168
      %v303 = vunpack.c.0.s8 %v302
      %v304 = vlaneseq
      %v305 = vshrl.u32 %v304, 7
      %v306 = vsub.s32 %v303, %v305
      %v307 = vrot.slane %v291, %v306
      %v309 = vunpack.c.l.s4 1966171168
      %v310 = vunpack.c.0.s8 %v309
      %v311 = vlaneseq
      %v312 = vshrl.u32 %v311, 7
      %v313 = vsub.s32 %v310, %v312
      %v314 = vrot.slane %v298, %v313
      %v316 = vunpack.c.l.s4 1966171168
      %v317 = vunpack.c.0.s8 %v316
      %v318 = vlaneseq
      %v319 = vshrl.u32 %v318, 7
      %v320 = vsub.s32 %v317, %v319
      %v321 = vrot.slane %v299, %v320
      %v323 = vunpack.c.l.s4 1966171168
      %v324 = vunpack.c.0.s8 %v323
      %v325 = vlaneseq
      %v326 = vshrl.u32 %v325, 7
      %v327 = vsub.s32 %v324, %v326
      %v328 = vrot.slane %v300, %v327
      %v329 = vcombine.high %v307, %v307
      %v330 = vcombine.high %v314, %v314
      %v331 = vcombine.high %v321, %v321
      %v332 = vcombine.high %v328, %v328
      %v333 = vlaneseq
      %v334 = vshrl.u32 %v333, 7
      %v335 = vsub.s32 0, %v334
      %v336 = vrot.slane %v307, %v335
      %v337 = vlaneseq
      %v338 = vshrl.u32 %v337, 7
      %v339 = vsub.s32 0, %v338
      %v340 = vrot.slane %v321, %v339
      %v341 = vlaneseq
      %v342 = vshrl.u32 %v341, 7
      %v343 = vsub.s32 0, %v342
      %v344 = vrot.slane %v329, %v343
      %v345 = vlaneseq
      %v346 = vshrl.u32 %v345, 7
      %v347 = vsub.s32 0, %v346
      %v348 = vrot.slane %v331, %v347
      %v349 = vlaneseq
      %v350 = vshrl.u32 %v349, 7
      %v351 = vsub.s32 0, %v350
      %v352 = vrot.slane %v314, %v351
      %v353 = vlaneseq
      %v354 = vshrl.u32 %v353, 7
      %v355 = vsub.s32 0, %v354
      %v356 = vrot.slane %v328, %v355
      %v357 = vlaneseq
      %v358 = vshrl.u32 %v357, 7
      %v359 = vsub.s32 0, %v358
      %v360 = vrot.slane %v330, %v359
      %v361 = vlaneseq
      %v362 = vshrl.u32 %v361, 7
      %v363 = vsub.s32 0, %v362
      %v364 = vrot.slane %v332, %v363
      %v373 = vsub.f32 %v336, %v50
      %v374 = vsub.f32 %v340, %v50
      %v375 = vsub.f32 %v344, %v50
      %v376 = vsub.f32 %v348, %v50
      %v377 = vsub.f32 %v352, %v50
      %v378 = vsub.f32 %v356, %v50
      %v379 = vsub.f32 %v360, %v50
      %v380 = vsub.f32 %v364, %v50
      %v381 = vmul.f32 %v373, %v373
      %v382 = vmul.f32 %v374, %v374
      %v383 = vmul.f32 %v375, %v375
      %v384 = vmul.f32 %v376, %v376
      %v385 = vmul.f32 %v377, %v377
      %v386 = vmul.f32 %v378, %v378
      %v387 = vmul.f32 %v379, %v379
      %v388 = vmul.f32 %v380, %v380
      %v389 = vadd.f32 %v275, %v381
      %v390 = vadd.f32 %v276, %v382
      %v391 = vadd.f32 %v277, %v383
      %v392 = vadd.f32 %v278, %v384
      %v393 = vadd.f32 %v279, %v385
      %v394 = vadd.f32 %v280, %v386
      %v395 = vadd.f32 %v281, %v387
      %v396 = vadd.f32 %v282, %v388
      loop: start=0, step=1, limit=9
      $region25: #{tpu_custom_call.1} parent=21 // loop_pre_header
        _
      $region26: #{tpu_custom_call.1} parent=21 // loop_header
        %s398 = sphi 0, %s402
        %p399 = scmp.ge.s32.totalorder %s398, 9
        %s403 = sphi -16384.0, %s636
        %v404 = vphi 1.0, %v635
        %v405 = vphi 1.0, %v603
        %v406 = vphi 1.0, %v604
        %v407 = vphi 1.0, %v605
        %v408 = vphi 1.0, %v606
        %v409 = vphi 1.0, %v607
        %v410 = vphi 1.0, %v608
        %v411 = vphi 1.0, %v609
        %v412 = vphi 1.0, %v610
        %v413 = vphi 0.0, %v619
        %v414 = vphi 0.0, %v620
        %v415 = vphi 0.0, %v621
        %v416 = vphi 0.0, %v622
        %v417 = vphi 0.0, %v623
        %v418 = vphi 0.0, %v624
        %v419 = vphi 0.0, %v625
        %v420 = vphi 0.0, %v626
      $region27: #{tpu_custom_call.1} parent=21 // loop_header_branch
        %401 = sbr.rel (%p399) target = $region31
      $region28: #{tpu_custom_call.1} parent=21 // loop_body
        %v421 = vstv %s403
        %v422 = vmul.f32 %v421, %v389
        %v423 = vmul.f32 %v421, %v390
        %v424 = vmul.f32 %v421, %v391
        %v425 = vmul.f32 %v421, %v392
        %v426 = vmul.f32 %v421, %v393
        %v427 = vmul.f32 %v421, %v394
        %v428 = vmul.f32 %v421, %v395
        %v429 = vmul.f32 %v421, %v396
        %v430 = vmul.f32 %v422, 1.442695
        %v431 = vpow.pop %v430
        %v432 = vmul.f32 %v423, 1.442695
        %v433 = vpow.pop %v432
        %v434 = vmul.f32 %v424, 1.442695
        %v435 = vpow.pop %v434
        %v436 = vmul.f32 %v425, 1.442695
        %v437 = vpow.pop %v436
        %v438 = vmul.f32 %v426, 1.442695
        %v439 = vpow.pop %v438
        %v440 = vmul.f32 %v427, 1.442695
        %v441 = vpow.pop %v440
        %v442 = vmul.f32 %v428, 1.442695
        %v443 = vpow.pop %v442
        %v444 = vmul.f32 %v429, 1.442695
        %v445 = vpow.pop %v444
        %v446 = vmul.f32 %v431, %v405
        %v447 = vmul.f32 %v433, %v406
        %v448 = vmul.f32 %v435, %v407
        %v449 = vmul.f32 %v437, %v408
        %v450 = vmul.f32 %v439, %v409
        %v451 = vmul.f32 %v441, %v410
        %v452 = vmul.f32 %v443, %v411
        %v453 = vmul.f32 %v445, %v412
        %v454 = vadd.f32 %v446, %v447
        %v455 = vadd.f32 %v454, %v448
        %v456 = vadd.f32 %v455, %v449
        %v457 = vadd.f32 %v456, %v450
        %v458 = vadd.f32 %v457, %v451
        %v459 = vadd.f32 %v458, %v452
        %v460 = vadd.f32 %v459, %v453
        %v461 = vadd.f32 %v460, 1e-09
        %v462 = vrcp.pop %v461
        %v463 = vmul.f32 %v461, %v462
        %v464 = vsub.f32 2.0, %v463
        %v465 = vmul.f32 %v462, %v464
        %v466 = vmul.f32 %v404, %v465
        %v467 = vmul.f32 %v431, %v466
        %v468 = vmul.f32 %v433, %v466
        %v469 = vmul.f32 %v435, %v466
        %v470 = vmul.f32 %v437, %v466
        %v471 = vmul.f32 %v439, %v466
        %v472 = vmul.f32 %v441, %v466
        %v473 = vmul.f32 %v443, %v466
        %v474 = vmul.f32 %v445, %v466
        %v475 = vrot.slane %v467, 4
        %v476 = vadd.f32 %v467, %v475
        %v477 = vrot.slane %v476, 2
        %v478 = vadd.f32 %v476, %v477
        %v479 = vrot.slane %v478, 1
        %v480 = vadd.f32 %v478, %v479
        %v481 = vrot.slane %v468, 4
        %v482 = vadd.f32 %v468, %v481
        %v483 = vrot.slane %v482, 2
        %v484 = vadd.f32 %v482, %v483
        %v485 = vrot.slane %v484, 1
        %v486 = vadd.f32 %v484, %v485
        %v487 = vrot.slane %v469, 4
        %v488 = vadd.f32 %v469, %v487
        %v489 = vrot.slane %v488, 2
        %v490 = vadd.f32 %v488, %v489
        %v491 = vrot.slane %v490, 1
        %v492 = vadd.f32 %v490, %v491
        %v493 = vrot.slane %v470, 4
        %v494 = vadd.f32 %v470, %v493
        %v495 = vrot.slane %v494, 2
        %v496 = vadd.f32 %v494, %v495
        %v497 = vrot.slane %v496, 1
        %v498 = vadd.f32 %v496, %v497
        %v499 = vrot.slane %v471, 4
        %v500 = vadd.f32 %v471, %v499
        %v501 = vrot.slane %v500, 2
        %v502 = vadd.f32 %v500, %v501
        %v503 = vrot.slane %v502, 1
        %v504 = vadd.f32 %v502, %v503
        %v505 = vrot.slane %v472, 4
        %v506 = vadd.f32 %v472, %v505
        %v507 = vrot.slane %v506, 2
        %v508 = vadd.f32 %v506, %v507
        %v509 = vrot.slane %v508, 1
        %v510 = vadd.f32 %v508, %v509
        %v511 = vrot.slane %v473, 4
        %v512 = vadd.f32 %v473, %v511
        %v513 = vrot.slane %v512, 2
        %v514 = vadd.f32 %v512, %v513
        %v515 = vrot.slane %v514, 1
        %v516 = vadd.f32 %v514, %v515
        %v517 = vrot.slane %v474, 4
        %v518 = vadd.f32 %v474, %v517
        %v519 = vrot.slane %v518, 2
        %v520 = vadd.f32 %v518, %v519
        %v521 = vrot.slane %v520, 1
        %v522 = vadd.f32 %v520, %v521
        %v523 = vmul.f32 %v480, %v405
        %v524 = vmul.f32 %v486, %v406
        %v525 = vmul.f32 %v492, %v407
        %v526 = vmul.f32 %v498, %v408
        %v527 = vmul.f32 %v504, %v409
        %v528 = vmul.f32 %v510, %v410
        %v529 = vmul.f32 %v516, %v411
        %v530 = vmul.f32 %v522, %v412
        %v531 = vadd.f32 %v523, 1e-09
        %v532 = vadd.f32 %v524, 1e-09
        %v533 = vadd.f32 %v525, 1e-09
        %v534 = vadd.f32 %v526, 1e-09
        %v535 = vadd.f32 %v527, 1e-09
        %v536 = vadd.f32 %v528, 1e-09
        %v537 = vadd.f32 %v529, 1e-09
        %v538 = vadd.f32 %v530, 1e-09
        %v539 = vrcp.pop %v531
        %v540 = vrcp.pop %v532
        %v541 = vrcp.pop %v533
        %v542 = vrcp.pop %v534
        %v543 = vrcp.pop %v535
        %v544 = vrcp.pop %v536
        %v545 = vrcp.pop %v537
        %v546 = vrcp.pop %v538
        %v547 = vmul.f32 %v531, %v539
        %v548 = vmul.f32 %v532, %v540
        %v549 = vmul.f32 %v533, %v541
        %v550 = vmul.f32 %v534, %v542
        %v551 = vmul.f32 %v535, %v543
        %v552 = vmul.f32 %v536, %v544
        %v553 = vmul.f32 %v537, %v545
        %v554 = vmul.f32 %v538, %v546
        %v555 = vsub.f32 2.0, %v547
        %v556 = vsub.f32 2.0, %v548
        %v557 = vsub.f32 2.0, %v549
        %v558 = vsub.f32 2.0, %v550
        %v559 = vsub.f32 2.0, %v551
        %v560 = vsub.f32 2.0, %v552
        %v561 = vsub.f32 2.0, %v553
        %v562 = vsub.f32 2.0, %v554
        %v563 = vmul.f32 %v539, %v555
        %v564 = vmul.f32 %v540, %v556
        %v565 = vmul.f32 %v541, %v557
        %v566 = vmul.f32 %v542, %v558
        %v567 = vmul.f32 %v543, %v559
        %v568 = vmul.f32 %v544, %v560
        %v569 = vmul.f32 %v545, %v561
        %v570 = vmul.f32 %v546, %v562
        %v571 = vmul.f32 %v405, %v563
        %v572 = vmul.f32 %v406, %v564
        %v573 = vmul.f32 %v407, %v565
        %v574 = vmul.f32 %v408, %v566
        %v575 = vmul.f32 %v409, %v567
        %v576 = vmul.f32 %v410, %v568
        %v577 = vmul.f32 %v411, %v569
        %v578 = vmul.f32 %v412, %v570
        %v579 = vmin.f32 %v571, 1.0
        %v580 = vmin.f32 %v572, 1.0
        %v581 = vmin.f32 %v573, 1.0
        %v582 = vmin.f32 %v574, 1.0
        %v583 = vmin.f32 %v575, 1.0
        %v584 = vmin.f32 %v576, 1.0
        %v585 = vmin.f32 %v577, 1.0
        %v586 = vmin.f32 %v578, 1.0
        %v587 = vmul.f32 %v579, %v405
        %v588 = vmul.f32 %v580, %v406
        %v589 = vmul.f32 %v581, %v407
        %v590 = vmul.f32 %v582, %v408
        %v591 = vmul.f32 %v583, %v409
        %v592 = vmul.f32 %v584, %v410
        %v593 = vmul.f32 %v585, %v411
        %v594 = vmul.f32 %v586, %v412
        %v595 = vsub.f32 %v405, %v523
        %v596 = vsub.f32 %v406, %v524
        %v597 = vsub.f32 %v407, %v525
        %v598 = vsub.f32 %v408, %v526
        %v599 = vsub.f32 %v409, %v527
        %v600 = vsub.f32 %v410, %v528
        %v601 = vsub.f32 %v411, %v529
        %v602 = vsub.f32 %v412, %v530
        %v603 = vmax.f32 %v595, 0.0
        %v604 = vmax.f32 %v596, 0.0
        %v605 = vmax.f32 %v597, 0.0
        %v606 = vmax.f32 %v598, 0.0
        %v607 = vmax.f32 %v599, 0.0
        %v608 = vmax.f32 %v600, 0.0
        %v609 = vmax.f32 %v601, 0.0
        %v610 = vmax.f32 %v602, 0.0
        %v611 = vmul.f32 %v467, %v587
        %v612 = vmul.f32 %v468, %v588
        %v613 = vmul.f32 %v469, %v589
        %v614 = vmul.f32 %v470, %v590
        %v615 = vmul.f32 %v471, %v591
        %v616 = vmul.f32 %v472, %v592
        %v617 = vmul.f32 %v473, %v593
        %v618 = vmul.f32 %v474, %v594
        %v619 = vadd.f32 %v413, %v611
        %v620 = vadd.f32 %v414, %v612
        %v621 = vadd.f32 %v415, %v613
        %v622 = vadd.f32 %v416, %v614
        %v623 = vadd.f32 %v417, %v615
        %v624 = vadd.f32 %v418, %v616
        %v625 = vadd.f32 %v419, %v617
        %v626 = vadd.f32 %v420, %v618
        %v627 = vadd.f32 %v611, %v612
        %v628 = vadd.f32 %v627, %v613
        %v629 = vadd.f32 %v628, %v614
        %v630 = vadd.f32 %v629, %v615
        %v631 = vadd.f32 %v630, %v616
        %v632 = vadd.f32 %v631, %v617
        %v633 = vadd.f32 %v632, %v618
        %v634 = vsub.f32 %v404, %v633
        %v635 = vmax.f32 %v634, 0.0
        %s636 = smul.f32 %s403, 0.25
      $region29: #{tpu_custom_call.1} parent=21 // loop_footer
        %s402 = sadd.s32 1, %s398
      $region30: #{tpu_custom_call.1} parent=21 // loop_footer_branch
        %397 = sbr.rel target = $region26
      $region31: #{tpu_custom_call.1} parent=21 // loop_exit
        _
      %v637 = vadd.f32 %v405, %v406
      %v638 = vadd.f32 %v637, %v407
      %v639 = vadd.f32 %v638, %v408
      %v640 = vadd.f32 %v639, %v409
      %v641 = vadd.f32 %v640, %v410
      %v642 = vadd.f32 %v641, %v411
      %v643 = vadd.f32 %v642, %v412
      %v644 = vadd.f32 %v643, 1e-09
      %v645 = vrcp.pop %v644
      %v646 = vmul.f32 %v644, %v645
      %v647 = vsub.f32 2.0, %v646
      %v648 = vmul.f32 %v645, %v647
      %v649 = vmul.f32 %v404, %v648
      %v650 = vrot.slane %v649, 4
      %v651 = vadd.f32 %v649, %v650
      %v652 = vrot.slane %v651, 2
      %v653 = vadd.f32 %v651, %v652
      %v654 = vrot.slane %v653, 1
      %v655 = vadd.f32 %v653, %v654
      %v656 = vmul.f32 %v655, %v405
      %v657 = vmul.f32 %v655, %v406
      %v658 = vmul.f32 %v655, %v407
      %v659 = vmul.f32 %v655, %v408
      %v660 = vmul.f32 %v655, %v409
      %v661 = vmul.f32 %v655, %v410
      %v662 = vmul.f32 %v655, %v411
      %v663 = vmul.f32 %v655, %v412
      %v664 = vadd.f32 %v656, 1e-09
      %v665 = vadd.f32 %v657, 1e-09
      %v666 = vadd.f32 %v658, 1e-09
      %v667 = vadd.f32 %v659, 1e-09
      %v668 = vadd.f32 %v660, 1e-09
      %v669 = vadd.f32 %v661, 1e-09
      %v670 = vadd.f32 %v662, 1e-09
      %v671 = vadd.f32 %v663, 1e-09
      %v672 = vrcp.pop %v664
      %v673 = vrcp.pop %v665
      %v674 = vrcp.pop %v666
      %v675 = vrcp.pop %v667
      %v676 = vrcp.pop %v668
      %v677 = vrcp.pop %v669
      %v678 = vrcp.pop %v670
      %v679 = vrcp.pop %v671
      %v680 = vmul.f32 %v664, %v672
      %v681 = vmul.f32 %v665, %v673
      %v682 = vmul.f32 %v666, %v674
      %v683 = vmul.f32 %v667, %v675
      %v684 = vmul.f32 %v668, %v676
      %v685 = vmul.f32 %v669, %v677
      %v686 = vmul.f32 %v670, %v678
      %v687 = vmul.f32 %v671, %v679
      %v688 = vsub.f32 2.0, %v680
      %v689 = vsub.f32 2.0, %v681
      %v690 = vsub.f32 2.0, %v682
      %v691 = vsub.f32 2.0, %v683
      %v692 = vsub.f32 2.0, %v684
      %v693 = vsub.f32 2.0, %v685
      %v694 = vsub.f32 2.0, %v686
      %v695 = vsub.f32 2.0, %v687
      %v696 = vmul.f32 %v672, %v688
      %v697 = vmul.f32 %v673, %v689
      %v698 = vmul.f32 %v674, %v690
      %v699 = vmul.f32 %v675, %v691
      %v700 = vmul.f32 %v676, %v692
      %v701 = vmul.f32 %v677, %v693
      %v702 = vmul.f32 %v678, %v694
      %v703 = vmul.f32 %v679, %v695
      %v704 = vmul.f32 %v405, %v696
      %v705 = vmul.f32 %v406, %v697
      %v706 = vmul.f32 %v407, %v698
      %v707 = vmul.f32 %v408, %v699
      %v708 = vmul.f32 %v409, %v700
      %v709 = vmul.f32 %v410, %v701
      %v710 = vmul.f32 %v411, %v702
      %v711 = vmul.f32 %v412, %v703
      %v712 = vmin.f32 %v704, 1.0
      %v713 = vmin.f32 %v705, 1.0
      %v714 = vmin.f32 %v706, 1.0
      %v715 = vmin.f32 %v707, 1.0
      %v716 = vmin.f32 %v708, 1.0
      %v717 = vmin.f32 %v709, 1.0
      %v718 = vmin.f32 %v710, 1.0
      %v719 = vmin.f32 %v711, 1.0
      %v720 = vmul.f32 %v712, %v405
      %v721 = vmul.f32 %v713, %v406
      %v722 = vmul.f32 %v714, %v407
      %v723 = vmul.f32 %v715, %v408
      %v724 = vmul.f32 %v716, %v409
      %v725 = vmul.f32 %v717, %v410
      %v726 = vmul.f32 %v718, %v411
      %v727 = vmul.f32 %v719, %v412
      %v728 = vmul.f32 %v649, %v720
      %v729 = vmul.f32 %v649, %v721
      %v730 = vmul.f32 %v649, %v722
      %v731 = vmul.f32 %v649, %v723
      %v732 = vmul.f32 %v649, %v724
      %v733 = vmul.f32 %v649, %v725
      %v734 = vmul.f32 %v649, %v726
      %v735 = vmul.f32 %v649, %v727
      %v736 = vadd.f32 %v413, %v728
      %v737 = vadd.f32 %v414, %v729
      %v738 = vadd.f32 %v415, %v730
      %v739 = vadd.f32 %v416, %v731
      %v740 = vadd.f32 %v417, %v732
      %v741 = vadd.f32 %v418, %v733
      %v742 = vadd.f32 %v419, %v734
      %v743 = vadd.f32 %v420, %v735
      %v744 = vrsqrt.pop %v389
      %v745 = vmul.f32 %v389, %v744
      %vm746 = vcmp.eq.f32.partialorder %v389, inf
      %v747 = vsel %vm746, %v389, %v745
      %vm748 = vcmp.eq.f32.partialorder %v389, 0.0
      %v749 = vand.u32 %v389, 2147483648
      %v750 = vsel %vm748, %v749, %v747
      %v751 = vrsqrt.pop %v390
      %v752 = vmul.f32 %v390, %v751
      %vm753 = vcmp.eq.f32.partialorder %v390, inf
      %v754 = vsel %vm753, %v390, %v752
      %vm755 = vcmp.eq.f32.partialorder %v390, 0.0
      %v756 = vand.u32 %v390, 2147483648
      %v757 = vsel %vm755, %v756, %v754
      %v758 = vrsqrt.pop %v391
      %v759 = vmul.f32 %v391, %v758
      %vm760 = vcmp.eq.f32.partialorder %v391, inf
      %v761 = vsel %vm760, %v391, %v759
      %vm762 = vcmp.eq.f32.partialorder %v391, 0.0
      %v763 = vand.u32 %v391, 2147483648
      %v764 = vsel %vm762, %v763, %v761
      %v765 = vrsqrt.pop %v392
      %v766 = vmul.f32 %v392, %v765
      %vm767 = vcmp.eq.f32.partialorder %v392, inf
      %v768 = vsel %vm767, %v392, %v766
      %vm769 = vcmp.eq.f32.partialorder %v392, 0.0
      %v770 = vand.u32 %v392, 2147483648
      %v771 = vsel %vm769, %v770, %v768
      %v772 = vrsqrt.pop %v393
      %v773 = vmul.f32 %v393, %v772
      %vm774 = vcmp.eq.f32.partialorder %v393, inf
      %v775 = vsel %vm774, %v393, %v773
      %vm776 = vcmp.eq.f32.partialorder %v393, 0.0
      %v777 = vand.u32 %v393, 2147483648
      %v778 = vsel %vm776, %v777, %v775
      %v779 = vrsqrt.pop %v394
      %v780 = vmul.f32 %v394, %v779
      %vm781 = vcmp.eq.f32.partialorder %v394, inf
      %v782 = vsel %vm781, %v394, %v780
      %vm783 = vcmp.eq.f32.partialorder %v394, 0.0
      %v784 = vand.u32 %v394, 2147483648
      %v785 = vsel %vm783, %v784, %v782
      %v786 = vrsqrt.pop %v395
      %v787 = vmul.f32 %v395, %v786
      %vm788 = vcmp.eq.f32.partialorder %v395, inf
      %v789 = vsel %vm788, %v395, %v787
      %vm790 = vcmp.eq.f32.partialorder %v395, 0.0
      %v791 = vand.u32 %v395, 2147483648
      %v792 = vsel %vm790, %v791, %v789
      %v793 = vrsqrt.pop %v396
      %v794 = vmul.f32 %v396, %v793
      %vm795 = vcmp.eq.f32.partialorder %v396, inf
      %v796 = vsel %vm795, %v396, %v794
      %vm797 = vcmp.eq.f32.partialorder %v396, 0.0
      %v798 = vand.u32 %v396, 2147483648
      %v799 = vsel %vm797, %v798, %v796
      %v800 = vmul.f32 %v736, %v750
      %v801 = vmul.f32 %v737, %v757
      %v802 = vmul.f32 %v738, %v764
      %v803 = vmul.f32 %v739, %v771
      %v804 = vmul.f32 %v740, %v778
      %v805 = vmul.f32 %v741, %v785
      %v806 = vmul.f32 %v742, %v792
      %v807 = vmul.f32 %v743, %v799
      %v808 = vadd.f32 %v800, %v801
      %v809 = vadd.f32 %v808, %v802
      %v810 = vadd.f32 %v809, %v803
      %v811 = vadd.f32 %v810, %v804
      %v812 = vadd.f32 %v811, %v805
      %v813 = vadd.f32 %v812, %v806
      %v814 = vadd.f32 %v813, %v807
      %v815 = vrot.slane %v814, 4
      %v816 = vadd.f32 %v814, %v815
      %v817 = vrot.slane %v816, 2
      %v818 = vadd.f32 %v816, %v817
      %v819 = vrot.slane %v818, 1
      %v820 = vadd.f32 %v818, %v819
      %s821 = scalar_lea.vmem [#allocation7], %s41
      %822 = vst [vmem:[%s821] sm:$0x1] %v820
    $region22: #{tpu_custom_call.1} parent=1 // loop_footer
      %s45 = sadd.s32 1, %s41
    $region23: #{tpu_custom_call.1} parent=1 // loop_footer_branch
      %40 = sbr.rel target = $region19
    $region24: #{tpu_custom_call.1} parent=1 // loop_exit
      _
    // Predicated region
    $region32: #{tpu_custom_call.1} parent=1 // pred_check
      _
    $region33: #{tpu_custom_call.1} parent=1 // pred_check_branch
      %824 = sbr.rel (0) target = $region35
    $region34: #{tpu_custom_call.1} parent=1 // pred_region
      %s826 = ssub.s32 128, 128
      %827 = vsyncadd [#allocation4], %s826
      %s829 = sshll.u32 [#allocation7], 4
      %s830 = int_to_ptr.vmem [resolvable:$true] %s829
      %832 = dma.vmem_to_hbm [thread:$0]  %s830, 128, %s2, [#allocation4]
    $region35: #{tpu_custom_call.1} parent=1 // pred_fallthru
      _
    // Predicated region
    $region36: #{tpu_custom_call.1} parent=1 // pred_check
      _
    $region37: #{tpu_custom_call.1} parent=1 // pred_check_branch
      %834 = sbr.rel (0) target = $region39
    $region38: #{tpu_custom_call.1} parent=1 // pred_region
      %835 = dma.done [#allocation4], 128
    $region39: #{tpu_custom_call.1} parent=1 // pred_fallthru
      _
    %836 = vsyncpa [#allocation3], 1
    %837 = vsyncpa [#allocation6], 1
    %838 = vsyncpa [#allocation4], 1

</llo_original>
